<compile_context>
chip_gen: v6e
topology: v6e:2x2x1
jax: 0.10.0
libtpu: 0.0.40
codegen_flags: <defaults>
</compile_context>

<pallas_src>
import functools

import jax
import jax.numpy as jnp
import numpy as np
from jax import lax
from jax.experimental import pallas as pl
from jax.experimental.pallas import tpu as pltpu


def _sepconv_kernel(x_ref, w_ref, b_ref, o_ref, *, th, w_out):
    """One (batch, row-tile) step of the fused separable conv.

    x_ref : (1, H+2, W+2, Cin)  zero-padded NHWC image of this batch element
    w_ref : (9*Cin, Cout)       fused depthwise*pointwise weights
    b_ref : (1, Cout)           fused bias
    o_ref : (1, th*W, Cout)     flattened (rows, cols) output tile
    """
    cin = x_ref.shape[3]
    r = pl.program_id(1)

    # Padded-row slab needed by this output row tile: rows [r*th, r*th+th+2).
    row0 = pl.multiple_of(r * th, th)
    x_tile = x_ref[0, pl.ds(row0, th + 2), :, :]            # (th+2, W+2, Cin)

    # Do the 3 W-direction (sublane) shifts once; per-tap row shifts are
    # static slices along the outer H axis (cheap, no relayout).
    shifted = [x_tile[:, kj:kj + w_out, :] for kj in range(3)]

    taps = []
    for ki in range(3):
        for kj in range(3):
            taps.append(shifted[kj][ki:ki + th, :, :])      # (th, W, Cin)

    # im2col -> single 2-D MXU matmul with K = 9*Cin.
    patches = jnp.concatenate(taps, axis=-1)                # (th, W, 9*Cin)
    lhs = patches.reshape(th * w_out, 9 * cin)              # (th*W, 9*Cin)

    out = jnp.dot(lhs, w_ref[...], preferred_element_type=jnp.float32)
    out = out + b_ref[0, :]                                 # fused bias

    o_ref[...] = out[None, :, :].astype(o_ref.dtype)


def _pick_row_tile(H, W, Cin, Cout, max_rows=32, budget_bytes=12 << 20):
    """Largest divisor of H (<= max_rows) whose per-step working set fits."""
    best = 1
    for th in range(1, min(H, max_rows) + 1):
        if H % th:
            continue
        work = 4 * (
            (th + 2) * (W + 2) * Cin      # sliced input rows (f32)
            + 9 * th * W * Cin            # im2col patches (f32)
            + 2 * th * W * Cout           # double-buffered output block (f32)
        )
        if work <= budget_bytes:
            best = th
    return best


def _vmem_limit_bytes():
    # Raise the scoped-VMEM cap above the 16/32 MiB defaults but stay well
    # inside physical capacity on every generation (v7x: 64 MiB per TC).
    try:
        cap = pltpu.get_tpu_info().vmem_capacity_bytes
    except Exception:
        cap = 64 * 1024 * 1024
    return int(min(48 * 1024 * 1024, cap * 3 // 4))


def separable_conv2d(x_nchw, dw_w, dw_b, pw_w, pw_b, *, row_tile=None):
    """x_nchw: (B, Cin, H, W); returns (B, Cout, H, W) float32 (matches PyTorch).

    dw_w: (Cin, 1, 3, 3)  depthwise weight (groups=Cin), dw_b: (Cin,)
    pw_w: (Cout, Cin, 1, 1) pointwise weight,             pw_b: (Cout,)
    """
    x_nchw = x_nchw.astype(jnp.float32)
    B, Cin, H, W = x_nchw.shape
    Cout = pw_w.shape[0]

    # NCHW -> NHWC (channels on the lane axis) and zero-pad spatial dims by 1.
    x_nhwc = jnp.transpose(x_nchw, (0, 2, 3, 1))
    x_pad = jnp.pad(x_nhwc, ((0, 0), (1, 1), (1, 1), (0, 0)))
    Hp, Wp = H + 2, W + 2

    # Fold depthwise into pointwise (wrapper-side, tiny tensors).
    dw_k = jnp.transpose(dw_w[:, 0, :, :], (1, 2, 0)).astype(jnp.float32)  # (3,3,Cin)
    pw_k = jnp.transpose(pw_w[:, :, 0, 0], (1, 0)).astype(jnp.float32)     # (Cin,Cout)
    w_comb = (dw_k.reshape(9, Cin, 1) * pw_k.reshape(1, Cin, Cout)
              ).reshape(9 * Cin, Cout)                                     # (9*Cin,Cout)
    b_comb = (dw_b.astype(jnp.float32) @ pw_k
              + pw_b.astype(jnp.float32)).reshape(1, Cout)                 # (1,Cout)

    TH = row_tile if row_tile is not None else _pick_row_tile(H, W, Cin, Cout)
    if H % TH or ((TH * W) % 8 and TH * W != H * W):
        TH = H                       # fall back to one row tile per image
    n_row = H // TH

    kernel = functools.partial(_sepconv_kernel, th=TH, w_out=W)

    out_flat = pl.pallas_call(
        kernel,
        out_shape=jax.ShapeDtypeStruct((B, H * W, Cout), jnp.float32),
        grid_spec=pltpu.PrefetchScalarGridSpec(
            num_scalar_prefetch=0,
            grid=(B, n_row),
            in_specs=[
                # Whole padded image of the current batch element (re-DMA is
                # skipped while only the row-tile index changes).
                pl.BlockSpec((1, Hp, Wp, Cin), lambda b, r: (b, 0, 0, 0)),
                pl.BlockSpec((9 * Cin, Cout), lambda b, r: (0, 0)),
                pl.BlockSpec((1, Cout), lambda b, r: (0, 0)),
            ],
            out_specs=pl.BlockSpec((1, TH * W, Cout), lambda b, r: (b, r, 0)),
        ),
        compiler_params=pltpu.CompilerParams(
            dimension_semantics=("parallel", "parallel"),
            vmem_limit_bytes=_vmem_limit_bytes(),
        ),
    )(x_pad, w_comb, b_comb)

    out_nhwc = out_flat.reshape(B, H, W, Cout)
    return jnp.transpose(out_nhwc, (0, 3, 1, 2))            # back to NCHW


def _reference(x_nchw, dw_w, dw_b, pw_w, pw_b):
    """Pure-JAX reference using lax.conv_general_dilated (NCHW)."""
    x = x_nchw.astype(jnp.float32)
    Cin = x.shape[1]
    dw = lax.conv_general_dilated(
        x, dw_w.astype(jnp.float32),
        window_strides=(1, 1), padding=((1, 1), (1, 1)),
        dimension_numbers=("NCHW", "OIHW", "NCHW"),
        feature_group_count=Cin,
    ) + dw_b.reshape(1, Cin, 1, 1)
    pw = lax.conv_general_dilated(
        dw, pw_w.astype(jnp.float32),
        window_strides=(1, 1), padding=((0, 0), (0, 0)),
        dimension_numbers=("NCHW", "OIHW", "NCHW"),
    ) + pw_b.reshape(1, -1, 1, 1)
    return pw


if __name__ == "__main__":
    key = jax.random.PRNGKey(0)
    B, Cin, Cout, H, W = 2, 4, 8, 16, 16

    k_x, k_dw, k_dwb, k_pw, k_pwb = jax.random.split(key, 5)
    x = jax.random.normal(k_x, (B, Cin, H, W), dtype=jnp.float32)

    # Deterministic synthetic parameters matching the PyTorch module shapes.
    dw_w = jax.random.normal(k_dw, (Cin, 1, 3, 3), dtype=jnp.float32) * 0.2
    dw_b = jax.random.normal(k_dwb, (Cin,), dtype=jnp.float32) * 0.1
    pw_w = jax.random.normal(k_pw, (Cout, Cin, 1, 1), dtype=jnp.float32) * 0.2
    pw_b = jax.random.normal(k_pwb, (Cout,), dtype=jnp.float32) * 0.1

    ref = jax.block_until_ready(_reference(x, dw_w, dw_b, pw_w, pw_b))

    # Explicit 8-row tiles: exercises the multi-row-tile path (grid = (B, 2)).
    out_tiled = jax.block_until_ready(
        separable_conv2d(x, dw_w, dw_b, pw_w, pw_b, row_tile=8))
    np.testing.assert_allclose(np.asarray(out_tiled), np.asarray(ref),
                               rtol=1e-4, atol=1e-4)

    # Auto-picked row tile.
    out_auto = jax.block_until_ready(
        separable_conv2d(x, dw_w, dw_b, pw_w, pw_b))
    np.testing.assert_allclose(np.asarray(out_auto), np.asarray(ref),
                               rtol=1e-4, atol=1e-4)

    print("KERNEL_OK")
</pallas_src>

<mosaic_0001>
module attributes {stable_mosaic.version = 11 : i64} {
  func.func @_sepconv_kernel(%arg0: i32, %arg1: i32, %arg2: memref<1x18x18x4xf32, #tpu.memory_space<vmem>>, %arg3: memref<36x8xf32, #tpu.memory_space<vmem>>, %arg4: memref<1x8xf32, #tpu.memory_space<vmem>>, %arg5: memref<1x128x8xf32, #tpu.memory_space<vmem>>) attributes {dimension_semantics = [#tpu.dimension_semantics<parallel>, #tpu.dimension_semantics<parallel>], iteration_bounds = array<i64: 2, 2>, scalar_prefetch = 0 : i64, scratch_operands = 0 : i64, tpu.core_type = #tpu.core_type<tc>, window_params = [{transform_indices = @transform_0, window_bounds = array<i64: 1, 18, 18, 4>}, {pipeline_mode = #tpu.pipeline_mode<synchronous>, transform_indices = @transform_1, window_bounds = array<i64: 36, 8>}, {pipeline_mode = #tpu.pipeline_mode<synchronous>, transform_indices = @transform_2, window_bounds = array<i64: 1, 8>}, {transform_indices = @transform_3, window_bounds = array<i64: 1, 128, 8>}]} {
    %c8_i32 = arith.constant 8 : i32
    %0 = arith.muli %arg1, %c8_i32 : i32
    %1 = tpu.assume_multiple %0, 8 : i32
    %c0 = arith.constant 0 : index
    %2 = arith.index_cast %1 : i32 to index
    %c0_0 = arith.constant 0 : index
    %c0_1 = arith.constant 0 : index
    %3 = vector.load %arg2[%c0, %2, %c0_0, %c0_1] : memref<1x18x18x4xf32, #tpu.memory_space<vmem>>, vector<1x10x18x4xf32>
    %4 = vector.shape_cast %3 : vector<1x10x18x4xf32> to vector<10x18x4xf32>
    %5 = vector.extract_strided_slice %4 {offsets = [0, 0, 0], sizes = [10, 16, 4], strides = [1, 1, 1]} : vector<10x18x4xf32> to vector<10x16x4xf32>
    %6 = vector.extract_strided_slice %4 {offsets = [0, 1, 0], sizes = [10, 16, 4], strides = [1, 1, 1]} : vector<10x18x4xf32> to vector<10x16x4xf32>
    %7 = vector.extract_strided_slice %4 {offsets = [0, 2, 0], sizes = [10, 16, 4], strides = [1, 1, 1]} : vector<10x18x4xf32> to vector<10x16x4xf32>
    %8 = vector.extract_strided_slice %5 {offsets = [0, 0, 0], sizes = [8, 16, 4], strides = [1, 1, 1]} : vector<10x16x4xf32> to vector<8x16x4xf32>
    %9 = vector.extract_strided_slice %6 {offsets = [0, 0, 0], sizes = [8, 16, 4], strides = [1, 1, 1]} : vector<10x16x4xf32> to vector<8x16x4xf32>
    %10 = vector.extract_strided_slice %7 {offsets = [0, 0, 0], sizes = [8, 16, 4], strides = [1, 1, 1]} : vector<10x16x4xf32> to vector<8x16x4xf32>
    %11 = vector.extract_strided_slice %5 {offsets = [1, 0, 0], sizes = [8, 16, 4], strides = [1, 1, 1]} : vector<10x16x4xf32> to vector<8x16x4xf32>
    %12 = vector.extract_strided_slice %6 {offsets = [1, 0, 0], sizes = [8, 16, 4], strides = [1, 1, 1]} : vector<10x16x4xf32> to vector<8x16x4xf32>
    %13 = vector.extract_strided_slice %7 {offsets = [1, 0, 0], sizes = [8, 16, 4], strides = [1, 1, 1]} : vector<10x16x4xf32> to vector<8x16x4xf32>
    %14 = vector.extract_strided_slice %5 {offsets = [2, 0, 0], sizes = [8, 16, 4], strides = [1, 1, 1]} : vector<10x16x4xf32> to vector<8x16x4xf32>
    %15 = vector.extract_strided_slice %6 {offsets = [2, 0, 0], sizes = [8, 16, 4], strides = [1, 1, 1]} : vector<10x16x4xf32> to vector<8x16x4xf32>
    %16 = vector.extract_strided_slice %7 {offsets = [2, 0, 0], sizes = [8, 16, 4], strides = [1, 1, 1]} : vector<10x16x4xf32> to vector<8x16x4xf32>
    %17 = tpu.concatenate %8, %9, %10, %11, %12, %13, %14, %15, %16 in 2 : vector<8x16x4xf32>, vector<8x16x4xf32>, vector<8x16x4xf32>, vector<8x16x4xf32>, vector<8x16x4xf32>, vector<8x16x4xf32>, vector<8x16x4xf32>, vector<8x16x4xf32>, vector<8x16x4xf32> -> vector<8x16x36xf32>
    %18 = vector.shape_cast %17 : vector<8x16x36xf32> to vector<128x36xf32>
    %c0_2 = arith.constant 0 : index
    %c0_3 = arith.constant 0 : index
    %19 = vector.load %arg3[%c0_2, %c0_3] : memref<36x8xf32, #tpu.memory_space<vmem>>, vector<36x8xf32>
    %cst = arith.constant dense<0.000000e+00> : vector<128x8xf32>
    %20 = tpu.matmul %18, %19, %cst {dimension_numbers = #tpu.dot_dimension_numbers<[1], [0], [0], [1], [0, 0, 1, 1], [], []>} : vector<128x36xf32>, vector<36x8xf32>, vector<128x8xf32> -> vector<128x8xf32>
    %c0_4 = arith.constant 0 : index
    %c0_5 = arith.constant 0 : index
    %21 = vector.load %arg4[%c0_4, %c0_5] : memref<1x8xf32, #tpu.memory_space<vmem>>, vector<1x8xf32>
    %22 = vector.shape_cast %21 : vector<1x8xf32> to vector<8xf32>
    %23 = vector.shape_cast %22 : vector<8xf32> to vector<1x8xf32>
    %24 = vector.broadcast %23 : vector<1x8xf32> to vector<128x8xf32>
    %25 = arith.addf %20, %24 : vector<128x8xf32>
    %26 = vector.shape_cast %25 : vector<128x8xf32> to vector<1x128x8xf32>
    %c0_6 = arith.constant 0 : index
    %c0_7 = arith.constant 0 : index
    %c0_8 = arith.constant 0 : index
    %27 = vector.load %arg5[%c0_6, %c0_7, %c0_8] : memref<1x128x8xf32, #tpu.memory_space<vmem>>, vector<1x128x8xf32>
    tpu.vector_store %arg5[%c0_6, %c0_7, %c0_8], %26 {strides = array<i32>} : memref<1x128x8xf32, #tpu.memory_space<vmem>>, vector<1x128x8xf32>,
    return
  }
  func.func @transform_0(%arg0: i32, %arg1: i32) -> (i32, i32, i32, i32) {
    %c0_i32 = arith.constant 0 : i32
    %c0_i32_0 = arith.constant 0 : i32
    %c0_i32_1 = arith.constant 0 : i32
    %c0_i32_2 = arith.constant 0 : i32
    return %arg0, %c0_i32, %c0_i32_0, %c0_i32_1 : i32, i32, i32, i32
  }
  func.func @transform_1(%arg0: i32, %arg1: i32) -> (i32, i32) {
    %c0_i32 = arith.constant 0 : i32
    %c0_i32_0 = arith.constant 0 : i32
    %c0_i32_1 = arith.constant 0 : i32
    return %c0_i32, %c0_i32_0 : i32, i32
  }
  func.func @transform_2(%arg0: i32, %arg1: i32) -> (i32, i32) {
    %c0_i32 = arith.constant 0 : i32
    %c0_i32_0 = arith.constant 0 : i32
    %c0_i32_1 = arith.constant 0 : i32
    return %c0_i32, %c0_i32_0 : i32, i32
  }
  func.func @transform_3(%arg0: i32, %arg1: i32) -> (i32, i32, i32) {
    %c0_i32 = arith.constant 0 : i32
    %c0_i32_0 = arith.constant 0 : i32
    return %arg0, %arg1, %c0_i32 : i32, i32, i32
  }
}

</mosaic_0001>

<llo_original>
// kernel: tpu_custom_call.1
$region0: #{tpu_custom_call.1}
  #allocation0 [shape = 'u32[]', space=smem, size = 0x4, offset = 0x4, fixed_abs, tag = 'smem constant byte address 0x4 - core index']
  #allocation1 [shape = 'u32[144,128]{1,0:T(1,128)}', space=vmem, size = 0x12000, scoped, tag = 'internal scratch']
  %s0 = inlined_call_operand.vmem [shape: f32[2,18,18,4], index: 0, kind: input, shape index: {}]
  %s1 = inlined_call_operand.vmem [shape: f32[36,8], index: 1, kind: input, shape index: {}]
  %s2 = inlined_call_operand.vmem [shape: f32[1,8], index: 2, kind: input, shape index: {}]
  %s3 = inlined_call_operand.vmem [shape: f32[2,256,8], index: 3, kind: output, shape index: {}]
  %s4 = sld [smem:[#allocation0]]
  $region45: #{tpu_custom_call.1} parent=0
    _
  %s6 = ssub.s32 1, %s4
  %s7 = scalar_select 0, %s6, %s4
  loop: start=0, step=1, limit=6
  $region2: #{tpu_custom_call.1} parent=0 // loop_pre_header
    _
  $region3: #{tpu_custom_call.1} parent=0 // loop_header
    %s9 = sphi 0, %s13
    %p10 = scmp.ge.s32.totalorder %s9, 6
    %s16 = sphi 0, %s28
    %s17 = sphi 0, %s24
    %s18 = sphi 0, %s16
    %s19 = sphi 0, %s17
    %s20 = sphi 0, %s18
    %s21 = sphi 0, %s19
    %s31 = sphi 0, %s33
    %s34 = sphi 0, %s31
    %s35 = sphi 0, %s34
    %s51 = sphi 0, %s35
    %s55 = sphi 0, %s55
    %s57 = sphi 0, %s55
    %s58 = sphi 0, %s57
    %s72 = sphi 0, %s58
    %s76 = sphi 0, %s76
    %s78 = sphi 0, %s76
    %s79 = sphi 0, %s78
    %s93 = sphi 0, %s79
    %s101 = sphi 0, %s103
    %s104 = sphi 0, %s101
    %s105 = sphi 0, %s104
    %s121 = sphi 0, %s105
  $region4: #{tpu_custom_call.1} parent=0 // loop_header_branch
    %12 = sbr.rel (%p10) target = $region8
  $region5: #{tpu_custom_call.1} parent=0 // loop_body
    %s14 = ssub.s32 %s9, 1
    %s15 = ssub.s32 %s9, 2
    %s22 = sadd.s32 1, %s17
    %p23 = scmp.ge.s32.totalorder %s22, 2
    %s24 = scalar_select %p23, 0, %s22
    %s25 = sadd.s32 1, %s16
    %s26 = scalar_select %p23, %s25, %s16
    %p27 = scmp.ge.s32.totalorder %s26, 2
    %s28 = scalar_select %p27, 0, %s26
    %s29 = ssub.s32 %s16, %s28
    %p30 = scmp.eq.s32.totalorder %s29, 0
    %s32 = sadd.s32 %s31, 1
    %s33 = scalar_select %p30, %s31, %s32
    %p36 = pneg %p30
    %p37 = scmp.eq.s32.totalorder %s9, 3
    %p38 = por %p36, %p37
    %p39 = scmp.ne.s32.totalorder %s31, %s34
    %p40 = scmp.eq.s32.totalorder %s9, 0
    %p41 = por %p39, %p40
    %p42 = scmp.ne.s32.totalorder %s31, %s34
    %p43 = scmp.eq.s32.totalorder %s14, 3
    %p44 = por %p42, %p43
    %p45 = scmp.ne.s32.totalorder %s34, %s35
    %p46 = scmp.eq.s32.totalorder %s14, 0
    %p47 = por %p45, %p46
    %p48 = scmp.ne.s32.totalorder %s34, %s35
    %p49 = scmp.eq.s32.totalorder %s15, 3
    %p50 = por %p48, %p49
    %p52 = scmp.ne.s32.totalorder %s35, %s51
    %p53 = scmp.eq.s32.totalorder %s15, 0
    %p54 = por %p52, %p53
    %s56 = sadd.s32 %s55, 1
    %p59 = scmp.eq.s32.totalorder %s9, 3
    %p60 = scmp.ne.s32.totalorder %s55, %s57
    %p61 = scmp.eq.s32.totalorder %s9, 0
    %p62 = por %p60, %p61
    %p63 = scmp.ne.s32.totalorder %s55, %s57
    %p64 = scmp.eq.s32.totalorder %s14, 3
    %p65 = por %p63, %p64
    %p66 = scmp.ne.s32.totalorder %s57, %s58
    %p67 = scmp.eq.s32.totalorder %s14, 0
    %p68 = por %p66, %p67
    %p69 = scmp.ne.s32.totalorder %s57, %s58
    %p70 = scmp.eq.s32.totalorder %s15, 3
    %p71 = por %p69, %p70
    %p73 = scmp.ne.s32.totalorder %s58, %s72
    %p74 = scmp.eq.s32.totalorder %s15, 0
    %p75 = por %p73, %p74
    %s77 = sadd.s32 %s76, 1
    %p80 = scmp.eq.s32.totalorder %s9, 3
    %p81 = scmp.ne.s32.totalorder %s76, %s78
    %p82 = scmp.eq.s32.totalorder %s9, 0
    %p83 = por %p81, %p82
    %p84 = scmp.ne.s32.totalorder %s76, %s78
    %p85 = scmp.eq.s32.totalorder %s14, 3
    %p86 = por %p84, %p85
    %p87 = scmp.ne.s32.totalorder %s78, %s79
    %p88 = scmp.eq.s32.totalorder %s14, 0
    %p89 = por %p87, %p88
    %p90 = scmp.ne.s32.totalorder %s78, %s79
    %p91 = scmp.eq.s32.totalorder %s15, 3
    %p92 = por %p90, %p91
    %p94 = scmp.ne.s32.totalorder %s79, %s93
    %p95 = scmp.eq.s32.totalorder %s15, 0
    %p96 = por %p94, %p95
    %s97 = ssub.s32 %s16, %s28
    %s98 = ssub.s32 %s17, %s24
    %s99 = sor.u32 %s97, %s98
    %p100 = scmp.eq.s32.totalorder %s99, 0
    %s102 = sadd.s32 %s101, 1
    %s103 = scalar_select %p100, %s101, %s102
    %p106 = pneg %p100
    %p107 = scmp.eq.s32.totalorder %s9, 3
    %p108 = por %p106, %p107
    %p109 = scmp.ne.s32.totalorder %s101, %s104
    %p110 = scmp.eq.s32.totalorder %s9, 0
    %p111 = por %p109, %p110
    %p112 = scmp.ne.s32.totalorder %s101, %s104
    %p113 = scmp.eq.s32.totalorder %s14, 3
    %p114 = por %p112, %p113
    %p115 = scmp.ne.s32.totalorder %s104, %s105
    %p116 = scmp.eq.s32.totalorder %s14, 0
    %p117 = por %p115, %p116
    %p118 = scmp.ne.s32.totalorder %s104, %s105
    %p119 = scmp.eq.s32.totalorder %s15, 3
    %p120 = por %p118, %p119
    %p122 = scmp.ne.s32.totalorder %s105, %s121
    %p123 = scmp.eq.s32.totalorder %s15, 0
    %p124 = por %p122, %p123
    %p125 = scmp.le.s32.totalorder 1, %s9
    %p126 = scmp.lt.s32.totalorder %s9, 5
    %p127 = pnand %p125, %p126
    %p128 = pneg %p127
    // Predicated region
    $region9: #{tpu_custom_call.1} parent=5 // pred_check
      _
    $region10: #{tpu_custom_call.1} parent=5 // pred_check_branch
      %130 = sbr.rel (%p127) target = $region12
    $region11: #{tpu_custom_call.1} parent=5 // pred_region
      %s131 = ssub.s32 %s9, 1
      // Predicated region
      $region13: #{tpu_custom_call.1} parent=11 // pred_check
        %p132 = pneg %p68
      $region14: #{tpu_custom_call.1} parent=11 // pred_check_branch
        %134 = sbr.rel (%p132) target = $region16
      $region15: #{tpu_custom_call.1} parent=11 // pred_region
        _
      $region16: #{tpu_custom_call.1} parent=11 // pred_fallthru
        _
      // Predicated region
      $region17: #{tpu_custom_call.1} parent=11 // pred_check
        %p135 = pneg %p89
      $region18: #{tpu_custom_call.1} parent=11 // pred_check_branch
        %137 = sbr.rel (%p135) target = $region20
      $region19: #{tpu_custom_call.1} parent=11 // pred_region
        _
      $region20: #{tpu_custom_call.1} parent=11 // pred_fallthru
        _
    $region12: #{tpu_custom_call.1} parent=5 // pred_fallthru
      _
    %p138 = scmp.lt.s32.totalorder %s9, 4
    // Predicated region
    $region21: #{tpu_custom_call.1} parent=5 // pred_check
      %p139 = pneg %p138
    $region22: #{tpu_custom_call.1} parent=5 // pred_check_branch
      %141 = sbr.rel (%p139) target = $region24
    $region23: #{tpu_custom_call.1} parent=5 // pred_region
      // Predicated region
      $region25: #{tpu_custom_call.1} parent=23 // pred_check
        %p142 = pneg %p41
      $region26: #{tpu_custom_call.1} parent=23 // pred_check_branch
        %144 = sbr.rel (%p142) target = $region28
      $region27: #{tpu_custom_call.1} parent=23 // pred_region
        %p145 = scmp.lt.s32.totalorder %s16, 1
        %s146 = scalar_select %p145, %s16, 1
        %s147 = smul.addr %s146, 54
        %s148 = smul.addr %s147, 8
        %s149 = scalar_lea.vmem %s0, %s148
      $region28: #{tpu_custom_call.1} parent=23 // pred_fallthru
        _
    $region24: #{tpu_custom_call.1} parent=5 // pred_fallthru
      _
    %p150 = scmp.le.s32.totalorder 1, %s9
    %p151 = scmp.lt.s32.totalorder %s9, 5
    %p152 = pnand %p150, %p151
    %p153 = pneg %p152
    // Predicated region
    $region29: #{tpu_custom_call.1} parent=5 // pred_check
      _
    $region30: #{tpu_custom_call.1} parent=5 // pred_check_branch
      %155 = sbr.rel (%p152) target = $region32
    $region31: #{tpu_custom_call.1} parent=5 // pred_region
      %s156 = ssub.s32 %s9, 1
      %p157 = scmp.lt.s32.totalorder %s18, 1
      %s158 = scalar_select %p157, %s18, 1
      %s159 = smul.addr %s158, 54
      %s160 = smul.addr %s159, 8
      %s161 = scalar_lea.vmem %s0, %s160
      %p162 = pneg %p47
      %p163 = pneg %p44
      %p164 = pneg %p68
      %p165 = pneg %p65
      %p166 = pneg %p89
      %p167 = pneg %p86
      %p168 = pneg %p117
      %p169 = pneg %p114
      %s170 = smul.u32 16, %s19
      %p171 = scmp.lt.s32.totalorder %s18, 1
      %s172 = scalar_select %p171, %s18, 1
      %p173 = scmp.lt.s32.totalorder %s170, 31
      %s174 = scalar_select %p173, %s170, 31
      %s175 = smul.addr %s172, 32
      %s176 = sadd.s32 %s174, %s175
      %s177 = smul.addr %s176, 8
      %s178 = scalar_lea.vmem %s3, %s177
      %p179 = scmp.lt.s32.totalorder %s18, 1
      %s180 = scalar_select %p179, %s18, 1
      %s181 = smul.addr %s180, 54
      %s182 = smul.addr %s181, 8
      %s183 = scalar_lea.vmem %s0, %s182
      %s184 = smul.u32 16, %s19
      %p185 = scmp.lt.s32.totalorder %s18, 1
      %s186 = scalar_select %p185, %s18, 1
      %p187 = scmp.lt.s32.totalorder %s184, 31
      %s188 = scalar_select %p187, %s184, 31
      %s189 = smul.addr %s186, 32
      %s190 = sadd.s32 %s188, %s189
      %s191 = smul.addr %s190, 8
      %s192 = scalar_lea.vmem %s3, %s191
      %s193 = smul.u32 16, %s19
      %s194 = smul.u32 %s19, 8
      %s195 = smul.u32 %s194, 24
      %s196 = scalar_lea.vmem %s183, %s195
      %v197 = vld [vmem:[%s196] sm:$0xff]
      %v198 = vld [vmem:[%s196 + $0x8] sm:$0xff]
      %v199 = vld [vmem:[%s196 + $0x10] sm:$0x3]
      %v200 = vld [vmem:[%s196 + $0x18] sm:$0xff]
      %v201 = vld [vmem:[%s196 + $0x20] sm:$0xff]
      %v202 = vld [vmem:[%s196 + $0x28] sm:$0x3]
      %v203 = vld [vmem:[%s196 + $0x30] sm:$0xff]
      %v204 = vld [vmem:[%s196 + $0x38] sm:$0xff]
      %v205 = vld [vmem:[%s196 + $0x40] sm:$0x3]
      %v206 = vld [vmem:[%s196 + $0x48] sm:$0xff]
      %v207 = vld [vmem:[%s196 + $0x50] sm:$0xff]
      %v208 = vld [vmem:[%s196 + $0x58] sm:$0x3]
      %v209 = vld [vmem:[%s196 + $0x60] sm:$0xff]
      %v210 = vld [vmem:[%s196 + $0x68] sm:$0xff]
      %v211 = vld [vmem:[%s196 + $0x70] sm:$0x3]
      %v212 = vld [vmem:[%s196 + $0x78] sm:$0xff]
      %v213 = vld [vmem:[%s196 + $0x80] sm:$0xff]
      %v214 = vld [vmem:[%s196 + $0x88] sm:$0x3]
      %v215 = vld [vmem:[%s196 + $0x90] sm:$0xff]
      %v216 = vld [vmem:[%s196 + $0x98] sm:$0xff]
      %v217 = vld [vmem:[%s196 + $0xa0] sm:$0x3]
      %v218 = vld [vmem:[%s196 + $0xa8] sm:$0xff]
      %v219 = vld [vmem:[%s196 + $0xb0] sm:$0xff]
      %v220 = vld [vmem:[%s196 + $0xb8] sm:$0x3]
      %v221 = vld [vmem:[%s196 + $0xc0] sm:$0xff]
      %v222 = vld [vmem:[%s196 + $0xc8] sm:$0xff]
      %v223 = vld [vmem:[%s196 + $0xd0] sm:$0x3]
      %v224 = vld [vmem:[%s196 + $0xd8] sm:$0xff]
      %v225 = vld [vmem:[%s196 + $0xe0] sm:$0xff]
      %v226 = vld [vmem:[%s196 + $0xe8] sm:$0x3]
      %vm251 = vcmask 1046528
      %v252 = vrot.slane %v197, 1
      %v253 = vrot.slane %v198, 1
      %v254 = vsel %vm251, %v252, %v253
      %v255 = vrot.slane %v199, 1
      %v256 = vsel %vm251, %v253, %v255
      %v257 = vrot.slane %v200, 1
      %v258 = vrot.slane %v201, 1
      %v259 = vsel %vm251, %v257, %v258
      %v260 = vrot.slane %v202, 1
      %v261 = vsel %vm251, %v258, %v260
      %v262 = vrot.slane %v203, 1
      %v263 = vrot.slane %v204, 1
      %v264 = vsel %vm251, %v262, %v263
      %v265 = vrot.slane %v205, 1
      %v266 = vsel %vm251, %v263, %v265
      %v267 = vrot.slane %v206, 1
      %v268 = vrot.slane %v207, 1
      %v269 = vsel %vm251, %v267, %v268
      %v270 = vrot.slane %v208, 1
      %v271 = vsel %vm251, %v268, %v270
      %v272 = vrot.slane %v209, 1
      %v273 = vrot.slane %v210, 1
      %v274 = vsel %vm251, %v272, %v273
      %v275 = vrot.slane %v211, 1
      %v276 = vsel %vm251, %v273, %v275
      %v277 = vrot.slane %v212, 1
      %v278 = vrot.slane %v213, 1
      %v279 = vsel %vm251, %v277, %v278
      %v280 = vrot.slane %v214, 1
      %v281 = vsel %vm251, %v278, %v280
      %v282 = vrot.slane %v215, 1
      %v283 = vrot.slane %v216, 1
      %v284 = vsel %vm251, %v282, %v283
      %v285 = vrot.slane %v217, 1
      %v286 = vsel %vm251, %v283, %v285
      %v287 = vrot.slane %v218, 1
      %v288 = vrot.slane %v219, 1
      %v289 = vsel %vm251, %v287, %v288
      %v290 = vrot.slane %v220, 1
      %v291 = vsel %vm251, %v288, %v290
      %292 = vrot.lane.b32.xlu0 %v254, 4
      %v293 = vpop.permute.xlu0 %292
      %294 = vrot.lane.b32.xlu0 %v256, 4
      %v295 = vpop.permute.xlu0 %294
      %296 = vrot.lane.b32.xlu0 %v259, 4
      %v297 = vpop.permute.xlu0 %296
      %298 = vrot.lane.b32.xlu0 %v261, 4
      %v299 = vpop.permute.xlu0 %298
      %300 = vrot.lane.b32.xlu0 %v264, 4
      %v301 = vpop.permute.xlu0 %300
      %302 = vrot.lane.b32.xlu0 %v266, 4
      %v303 = vpop.permute.xlu0 %302
      %304 = vrot.lane.b32.xlu0 %v269, 4
      %v305 = vpop.permute.xlu0 %304
      %306 = vrot.lane.b32.xlu0 %v271, 4
      %v307 = vpop.permute.xlu0 %306
      %308 = vrot.lane.b32.xlu0 %v274, 4
      %v309 = vpop.permute.xlu0 %308
      %310 = vrot.lane.b32.xlu0 %v276, 4
      %v311 = vpop.permute.xlu0 %310
      %312 = vrot.lane.b32.xlu0 %v279, 4
      %v313 = vpop.permute.xlu0 %312
      %314 = vrot.lane.b32.xlu0 %v281, 4
      %v315 = vpop.permute.xlu0 %314
      %316 = vrot.lane.b32.xlu0 %v284, 4
      %v317 = vpop.permute.xlu0 %316
      %318 = vrot.lane.b32.xlu0 %v286, 4
      %v319 = vpop.permute.xlu0 %318
      %320 = vrot.lane.b32.xlu0 %v289, 4
      %v321 = vpop.permute.xlu0 %320
      %322 = vrot.lane.b32.xlu0 %v291, 4
      %v323 = vpop.permute.xlu0 %322
      %vm340 = vcmask 1045504
      %v341 = vrot.slane %v197, 2
      %v342 = vrot.slane %v198, 2
      %v343 = vsel %vm340, %v341, %v342
      %v344 = vrot.slane %v199, 2
      %v345 = vsel %vm340, %v342, %v344
      %v346 = vrot.slane %v200, 2
      %v347 = vrot.slane %v201, 2
      %v348 = vsel %vm340, %v346, %v347
      %v349 = vrot.slane %v202, 2
      %v350 = vsel %vm340, %v347, %v349
      %v351 = vrot.slane %v203, 2
      %v352 = vrot.slane %v204, 2
      %v353 = vsel %vm340, %v351, %v352
      %v354 = vrot.slane %v205, 2
      %v355 = vsel %vm340, %v352, %v354
      %v356 = vrot.slane %v206, 2
      %v357 = vrot.slane %v207, 2
      %v358 = vsel %vm340, %v356, %v357
      %v359 = vrot.slane %v208, 2
      %v360 = vsel %vm340, %v357, %v359
      %v361 = vrot.slane %v209, 2
      %v362 = vrot.slane %v210, 2
      %v363 = vsel %vm340, %v361, %v362
      %v364 = vrot.slane %v211, 2
      %v365 = vsel %vm340, %v362, %v364
      %v366 = vrot.slane %v212, 2
      %v367 = vrot.slane %v213, 2
      %v368 = vsel %vm340, %v366, %v367
      %v369 = vrot.slane %v214, 2
      %v370 = vsel %vm340, %v367, %v369
      %v371 = vrot.slane %v215, 2
      %v372 = vrot.slane %v216, 2
      %v373 = vsel %vm340, %v371, %v372
      %v374 = vrot.slane %v217, 2
      %v375 = vsel %vm340, %v372, %v374
      %v376 = vrot.slane %v218, 2
      %v377 = vrot.slane %v219, 2
      %v378 = vsel %vm340, %v376, %v377
      %v379 = vrot.slane %v220, 2
      %v380 = vsel %vm340, %v377, %v379
      %381 = vrot.lane.b32.xlu0 %v343, 8
      %v382 = vpop.permute.xlu0 %381
      %383 = vrot.lane.b32.xlu0 %v345, 8
      %v384 = vpop.permute.xlu0 %383
      %385 = vrot.lane.b32.xlu0 %v348, 8
      %v386 = vpop.permute.xlu0 %385
      %387 = vrot.lane.b32.xlu0 %v350, 8
      %v388 = vpop.permute.xlu0 %387
      %389 = vrot.lane.b32.xlu0 %v353, 8
      %v390 = vpop.permute.xlu0 %389
      %391 = vrot.lane.b32.xlu0 %v355, 8
      %v392 = vpop.permute.xlu0 %391
      %393 = vrot.lane.b32.xlu0 %v358, 8
      %v394 = vpop.permute.xlu0 %393
      %395 = vrot.lane.b32.xlu0 %v360, 8
      %v396 = vpop.permute.xlu0 %395
      %397 = vrot.lane.b32.xlu0 %v363, 8
      %v398 = vpop.permute.xlu0 %397
      %399 = vrot.lane.b32.xlu0 %v365, 8
      %v400 = vpop.permute.xlu0 %399
      %401 = vrot.lane.b32.xlu0 %v368, 8
      %v402 = vpop.permute.xlu0 %401
      %403 = vrot.lane.b32.xlu0 %v370, 8
      %v404 = vpop.permute.xlu0 %403
      %405 = vrot.lane.b32.xlu0 %v373, 8
      %v406 = vpop.permute.xlu0 %405
      %407 = vrot.lane.b32.xlu0 %v375, 8
      %v408 = vpop.permute.xlu0 %407
      %409 = vrot.lane.b32.xlu0 %v378, 8
      %v410 = vpop.permute.xlu0 %409
      %411 = vrot.lane.b32.xlu0 %v380, 8
      %v412 = vpop.permute.xlu0 %411
      %431 = vrot.lane.b32.xlu0 %v200, 12
      %v432 = vpop.permute.xlu0 %431
      %433 = vrot.lane.b32.xlu0 %v201, 12
      %v434 = vpop.permute.xlu0 %433
      %435 = vrot.lane.b32.xlu0 %v203, 12
      %v436 = vpop.permute.xlu0 %435
      %437 = vrot.lane.b32.xlu0 %v204, 12
      %v438 = vpop.permute.xlu0 %437
      %439 = vrot.lane.b32.xlu0 %v206, 12
      %v440 = vpop.permute.xlu0 %439
      %441 = vrot.lane.b32.xlu0 %v207, 12
      %v442 = vpop.permute.xlu0 %441
      %443 = vrot.lane.b32.xlu0 %v209, 12
      %v444 = vpop.permute.xlu0 %443
      %445 = vrot.lane.b32.xlu0 %v210, 12
      %v446 = vpop.permute.xlu0 %445
      %447 = vrot.lane.b32.xlu0 %v212, 12
      %v448 = vpop.permute.xlu0 %447
      %449 = vrot.lane.b32.xlu0 %v213, 12
      %v450 = vpop.permute.xlu0 %449
      %451 = vrot.lane.b32.xlu0 %v215, 12
      %v452 = vpop.permute.xlu0 %451
      %453 = vrot.lane.b32.xlu0 %v216, 12
      %v454 = vpop.permute.xlu0 %453
      %455 = vrot.lane.b32.xlu0 %v218, 12
      %v456 = vpop.permute.xlu0 %455
      %457 = vrot.lane.b32.xlu0 %v219, 12
      %v458 = vpop.permute.xlu0 %457
      %459 = vrot.lane.b32.xlu0 %v221, 12
      %v460 = vpop.permute.xlu0 %459
      %461 = vrot.lane.b32.xlu0 %v222, 12
      %v462 = vpop.permute.xlu0 %461
      %v480 = vrot.slane %v221, 1
      %v481 = vrot.slane %v222, 1
      %v482 = vsel %vm251, %v480, %v481
      %v483 = vrot.slane %v223, 1
      %v484 = vsel %vm251, %v481, %v483
      %485 = vrot.lane.b32.xlu0 %v259, 16
      %v486 = vpop.permute.xlu0 %485
      %487 = vrot.lane.b32.xlu0 %v261, 16
      %v488 = vpop.permute.xlu0 %487
      %489 = vrot.lane.b32.xlu0 %v264, 16
      %v490 = vpop.permute.xlu0 %489
      %491 = vrot.lane.b32.xlu0 %v266, 16
      %v492 = vpop.permute.xlu0 %491
      %493 = vrot.lane.b32.xlu0 %v269, 16
      %v494 = vpop.permute.xlu0 %493
      %495 = vrot.lane.b32.xlu0 %v271, 16
      %v496 = vpop.permute.xlu0 %495
      %497 = vrot.lane.b32.xlu0 %v274, 16
      %v498 = vpop.permute.xlu0 %497
      %499 = vrot.lane.b32.xlu0 %v276, 16
      %v500 = vpop.permute.xlu0 %499
      %501 = vrot.lane.b32.xlu0 %v279, 16
      %v502 = vpop.permute.xlu0 %501
      %503 = vrot.lane.b32.xlu0 %v281, 16
      %v504 = vpop.permute.xlu0 %503
      %505 = vrot.lane.b32.xlu0 %v284, 16
      %v506 = vpop.permute.xlu0 %505
      %507 = vrot.lane.b32.xlu0 %v286, 16
      %v508 = vpop.permute.xlu0 %507
      %509 = vrot.lane.b32.xlu0 %v289, 16
      %v510 = vpop.permute.xlu0 %509
      %511 = vrot.lane.b32.xlu0 %v291, 16
      %v512 = vpop.permute.xlu0 %511
      %513 = vrot.lane.b32.xlu0 %v482, 16
      %v514 = vpop.permute.xlu0 %513
      %515 = vrot.lane.b32.xlu0 %v484, 16
      %v516 = vpop.permute.xlu0 %515
      %v533 = vrot.slane %v221, 2
      %v534 = vrot.slane %v222, 2
      %v535 = vsel %vm340, %v533, %v534
      %v536 = vrot.slane %v223, 2
      %v537 = vsel %vm340, %v534, %v536
      %538 = vrot.lane.b32.xlu0 %v348, 20
      %v539 = vpop.permute.xlu0 %538
      %540 = vrot.lane.b32.xlu0 %v350, 20
      %v541 = vpop.permute.xlu0 %540
      %542 = vrot.lane.b32.xlu0 %v353, 20
      %v543 = vpop.permute.xlu0 %542
      %544 = vrot.lane.b32.xlu0 %v355, 20
      %v545 = vpop.permute.xlu0 %544
      %546 = vrot.lane.b32.xlu0 %v358, 20
      %v547 = vpop.permute.xlu0 %546
      %548 = vrot.lane.b32.xlu0 %v360, 20
      %v549 = vpop.permute.xlu0 %548
      %550 = vrot.lane.b32.xlu0 %v363, 20
      %v551 = vpop.permute.xlu0 %550
      %552 = vrot.lane.b32.xlu0 %v365, 20
      %v553 = vpop.permute.xlu0 %552
      %554 = vrot.lane.b32.xlu0 %v368, 20
      %v555 = vpop.permute.xlu0 %554
      %556 = vrot.lane.b32.xlu0 %v370, 20
      %v557 = vpop.permute.xlu0 %556
      %558 = vrot.lane.b32.xlu0 %v373, 20
      %v559 = vpop.permute.xlu0 %558
      %560 = vrot.lane.b32.xlu0 %v375, 20
      %v561 = vpop.permute.xlu0 %560
      %562 = vrot.lane.b32.xlu0 %v378, 20
      %v563 = vpop.permute.xlu0 %562
      %564 = vrot.lane.b32.xlu0 %v380, 20
      %v565 = vpop.permute.xlu0 %564
      %566 = vrot.lane.b32.xlu0 %v535, 20
      %v567 = vpop.permute.xlu0 %566
      %568 = vrot.lane.b32.xlu0 %v537, 20
      %v569 = vpop.permute.xlu0 %568
      %588 = vrot.lane.b32.xlu0 %v203, 24
      %v589 = vpop.permute.xlu0 %588
      %590 = vrot.lane.b32.xlu0 %v204, 24
      %v591 = vpop.permute.xlu0 %590
      %592 = vrot.lane.b32.xlu0 %v206, 24
      %v593 = vpop.permute.xlu0 %592
      %594 = vrot.lane.b32.xlu0 %v207, 24
      %v595 = vpop.permute.xlu0 %594
      %596 = vrot.lane.b32.xlu0 %v209, 24
      %v597 = vpop.permute.xlu0 %596
      %598 = vrot.lane.b32.xlu0 %v210, 24
      %v599 = vpop.permute.xlu0 %598
      %600 = vrot.lane.b32.xlu0 %v212, 24
      %v601 = vpop.permute.xlu0 %600
      %602 = vrot.lane.b32.xlu0 %v213, 24
      %v603 = vpop.permute.xlu0 %602
      %604 = vrot.lane.b32.xlu0 %v215, 24
      %v605 = vpop.permute.xlu0 %604
      %606 = vrot.lane.b32.xlu0 %v216, 24
      %v607 = vpop.permute.xlu0 %606
      %608 = vrot.lane.b32.xlu0 %v218, 24
      %v609 = vpop.permute.xlu0 %608
      %610 = vrot.lane.b32.xlu0 %v219, 24
      %v611 = vpop.permute.xlu0 %610
      %612 = vrot.lane.b32.xlu0 %v221, 24
      %v613 = vpop.permute.xlu0 %612
      %614 = vrot.lane.b32.xlu0 %v222, 24
      %v615 = vpop.permute.xlu0 %614
      %616 = vrot.lane.b32.xlu0 %v224, 24
      %v617 = vpop.permute.xlu0 %616
      %618 = vrot.lane.b32.xlu0 %v225, 24
      %v619 = vpop.permute.xlu0 %618
      %v637 = vrot.slane %v224, 1
      %v638 = vrot.slane %v225, 1
      %v639 = vsel %vm251, %v637, %v638
      %v640 = vrot.slane %v226, 1
      %v641 = vsel %vm251, %v638, %v640
      %642 = vrot.lane.b32.xlu0 %v264, 28
      %v643 = vpop.permute.xlu0 %642
      %644 = vrot.lane.b32.xlu0 %v266, 28
      %v645 = vpop.permute.xlu0 %644
      %646 = vrot.lane.b32.xlu0 %v269, 28
      %v647 = vpop.permute.xlu0 %646
      %648 = vrot.lane.b32.xlu0 %v271, 28
      %v649 = vpop.permute.xlu0 %648
      %650 = vrot.lane.b32.xlu0 %v274, 28
      %v651 = vpop.permute.xlu0 %650
      %652 = vrot.lane.b32.xlu0 %v276, 28
      %v653 = vpop.permute.xlu0 %652
      %654 = vrot.lane.b32.xlu0 %v279, 28
      %v655 = vpop.permute.xlu0 %654
      %656 = vrot.lane.b32.xlu0 %v281, 28
      %v657 = vpop.permute.xlu0 %656
      %658 = vrot.lane.b32.xlu0 %v284, 28
      %v659 = vpop.permute.xlu0 %658
      %660 = vrot.lane.b32.xlu0 %v286, 28
      %v661 = vpop.permute.xlu0 %660
      %662 = vrot.lane.b32.xlu0 %v289, 28
      %v663 = vpop.permute.xlu0 %662
      %664 = vrot.lane.b32.xlu0 %v291, 28
      %v665 = vpop.permute.xlu0 %664
      %666 = vrot.lane.b32.xlu0 %v482, 28
      %v667 = vpop.permute.xlu0 %666
      %668 = vrot.lane.b32.xlu0 %v484, 28
      %v669 = vpop.permute.xlu0 %668
      %670 = vrot.lane.b32.xlu0 %v639, 28
      %v671 = vpop.permute.xlu0 %670
      %672 = vrot.lane.b32.xlu0 %v641, 28
      %v673 = vpop.permute.xlu0 %672
      %v690 = vrot.slane %v224, 2
      %v691 = vrot.slane %v225, 2
      %v692 = vsel %vm340, %v690, %v691
      %v693 = vrot.slane %v226, 2
      %v694 = vsel %vm340, %v691, %v693
      %695 = vrot.lane.b32.xlu0 %v353, 32
      %v696 = vpop.permute.xlu0 %695
      %697 = vrot.lane.b32.xlu0 %v355, 32
      %v698 = vpop.permute.xlu0 %697
      %699 = vrot.lane.b32.xlu0 %v358, 32
      %v700 = vpop.permute.xlu0 %699
      %701 = vrot.lane.b32.xlu0 %v360, 32
      %v702 = vpop.permute.xlu0 %701
      %703 = vrot.lane.b32.xlu0 %v363, 32
      %v704 = vpop.permute.xlu0 %703
      %705 = vrot.lane.b32.xlu0 %v365, 32
      %v706 = vpop.permute.xlu0 %705
      %707 = vrot.lane.b32.xlu0 %v368, 32
      %v708 = vpop.permute.xlu0 %707
      %709 = vrot.lane.b32.xlu0 %v370, 32
      %v710 = vpop.permute.xlu0 %709
      %711 = vrot.lane.b32.xlu0 %v373, 32
      %v712 = vpop.permute.xlu0 %711
      %713 = vrot.lane.b32.xlu0 %v375, 32
      %v714 = vpop.permute.xlu0 %713
      %715 = vrot.lane.b32.xlu0 %v378, 32
      %v716 = vpop.permute.xlu0 %715
      %717 = vrot.lane.b32.xlu0 %v380, 32
      %v718 = vpop.permute.xlu0 %717
      %719 = vrot.lane.b32.xlu0 %v535, 32
      %v720 = vpop.permute.xlu0 %719
      %721 = vrot.lane.b32.xlu0 %v537, 32
      %v722 = vpop.permute.xlu0 %721
      %723 = vrot.lane.b32.xlu0 %v692, 32
      %v724 = vpop.permute.xlu0 %723
      %725 = vrot.lane.b32.xlu0 %v694, 32
      %v726 = vpop.permute.xlu0 %725
      %vm743 = vcmask 31744
      %v744 = vsel %vm743, %v197, %v293
      %v745 = vsel %vm743, %v198, %v295
      %v746 = vsel %vm743, %v200, %v297
      %v747 = vsel %vm743, %v201, %v299
      %v748 = vsel %vm743, %v203, %v301
      %v749 = vsel %vm743, %v204, %v303
      %v750 = vsel %vm743, %v206, %v305
      %v751 = vsel %vm743, %v207, %v307
      %v752 = vsel %vm743, %v209, %v309
      %v753 = vsel %vm743, %v210, %v311
      %v754 = vsel %vm743, %v212, %v313
      %v755 = vsel %vm743, %v213, %v315
      %v756 = vsel %vm743, %v215, %v317
      %v757 = vsel %vm743, %v216, %v319
      %v758 = vsel %vm743, %v218, %v321
      %v759 = vsel %vm743, %v219, %v323
      %vm760 = vcmask 64512
      %v761 = vsel %vm760, %v744, %v382
      %v762 = vsel %vm760, %v745, %v384
      %v763 = vsel %vm760, %v746, %v386
      %v764 = vsel %vm760, %v747, %v388
      %v765 = vsel %vm760, %v748, %v390
      %v766 = vsel %vm760, %v749, %v392
      %v767 = vsel %vm760, %v750, %v394
      %v768 = vsel %vm760, %v751, %v396
      %v769 = vsel %vm760, %v752, %v398
      %v770 = vsel %vm760, %v753, %v400
      %v771 = vsel %vm760, %v754, %v402
      %v772 = vsel %vm760, %v755, %v404
      %v773 = vsel %vm760, %v756, %v406
      %v774 = vsel %vm760, %v757, %v408
      %v775 = vsel %vm760, %v758, %v410
      %v776 = vsel %vm760, %v759, %v412
      %vm777 = vcmask 97280
      %v778 = vsel %vm777, %v761, %v432
      %v779 = vsel %vm777, %v762, %v434
      %v780 = vsel %vm777, %v763, %v436
      %v781 = vsel %vm777, %v764, %v438
      %v782 = vsel %vm777, %v765, %v440
      %v783 = vsel %vm777, %v766, %v442
      %v784 = vsel %vm777, %v767, %v444
      %v785 = vsel %vm777, %v768, %v446
      %v786 = vsel %vm777, %v769, %v448
      %v787 = vsel %vm777, %v770, %v450
      %v788 = vsel %vm777, %v771, %v452
      %v789 = vsel %vm777, %v772, %v454
      %v790 = vsel %vm777, %v773, %v456
      %v791 = vsel %vm777, %v774, %v458
      %v792 = vsel %vm777, %v775, %v460
      %v793 = vsel %vm777, %v776, %v462
      %vm794 = vcmask 130048
      %v795 = vsel %vm794, %v778, %v486
      %v796 = vsel %vm794, %v779, %v488
      %v797 = vsel %vm794, %v780, %v490
      %v798 = vsel %vm794, %v781, %v492
      %v799 = vsel %vm794, %v782, %v494
      %v800 = vsel %vm794, %v783, %v496
      %v801 = vsel %vm794, %v784, %v498
      %v802 = vsel %vm794, %v785, %v500
      %v803 = vsel %vm794, %v786, %v502
      %v804 = vsel %vm794, %v787, %v504
      %v805 = vsel %vm794, %v788, %v506
      %v806 = vsel %vm794, %v789, %v508
      %v807 = vsel %vm794, %v790, %v510
      %v808 = vsel %vm794, %v791, %v512
      %v809 = vsel %vm794, %v792, %v514
      %v810 = vsel %vm794, %v793, %v516
      %vm811 = vcmask 162816
      %v812 = vsel %vm811, %v795, %v539
      %v813 = vsel %vm811, %v796, %v541
      %v814 = vsel %vm811, %v797, %v543
      %v815 = vsel %vm811, %v798, %v545
      %v816 = vsel %vm811, %v799, %v547
      %v817 = vsel %vm811, %v800, %v549
      %v818 = vsel %vm811, %v801, %v551
      %v819 = vsel %vm811, %v802, %v553
      %v820 = vsel %vm811, %v803, %v555
      %v821 = vsel %vm811, %v804, %v557
      %v822 = vsel %vm811, %v805, %v559
      %v823 = vsel %vm811, %v806, %v561
      %v824 = vsel %vm811, %v807, %v563
      %v825 = vsel %vm811, %v808, %v565
      %v826 = vsel %vm811, %v809, %v567
      %v827 = vsel %vm811, %v810, %v569
      %vm828 = vcmask 195584
      %v829 = vsel %vm828, %v812, %v589
      %v830 = vsel %vm828, %v813, %v591
      %v831 = vsel %vm828, %v814, %v593
      %v832 = vsel %vm828, %v815, %v595
      %v833 = vsel %vm828, %v816, %v597
      %v834 = vsel %vm828, %v817, %v599
      %v835 = vsel %vm828, %v818, %v601
      %v836 = vsel %vm828, %v819, %v603
      %v837 = vsel %vm828, %v820, %v605
      %v838 = vsel %vm828, %v821, %v607
      %v839 = vsel %vm828, %v822, %v609
      %v840 = vsel %vm828, %v823, %v611
      %v841 = vsel %vm828, %v824, %v613
      %v842 = vsel %vm828, %v825, %v615
      %v843 = vsel %vm828, %v826, %v617
      %v844 = vsel %vm828, %v827, %v619
      %vm845 = vcmask 228352
      %v846 = vsel %vm845, %v829, %v643
      %v847 = vsel %vm845, %v830, %v645
      %v848 = vsel %vm845, %v831, %v647
      %v849 = vsel %vm845, %v832, %v649
      %v850 = vsel %vm845, %v833, %v651
      %v851 = vsel %vm845, %v834, %v653
      %v852 = vsel %vm845, %v835, %v655
      %v853 = vsel %vm845, %v836, %v657
      %v854 = vsel %vm845, %v837, %v659
      %v855 = vsel %vm845, %v838, %v661
      %v856 = vsel %vm845, %v839, %v663
      %v857 = vsel %vm845, %v840, %v665
      %v858 = vsel %vm845, %v841, %v667
      %v859 = vsel %vm845, %v842, %v669
      %v860 = vsel %vm845, %v843, %v671
      %v861 = vsel %vm845, %v844, %v673
      %vm862 = vcmask 261120
      %v863 = vsel %vm862, %v846, %v696
      %v864 = vsel %vm862, %v847, %v698
      %v865 = vsel %vm862, %v848, %v700
      %v866 = vsel %vm862, %v849, %v702
      %v867 = vsel %vm862, %v850, %v704
      %v868 = vsel %vm862, %v851, %v706
      %v869 = vsel %vm862, %v852, %v708
      %v870 = vsel %vm862, %v853, %v710
      %v871 = vsel %vm862, %v854, %v712
      %v872 = vsel %vm862, %v855, %v714
      %v873 = vsel %vm862, %v856, %v716
      %v874 = vsel %vm862, %v857, %v718
      %v875 = vsel %vm862, %v858, %v720
      %v876 = vsel %vm862, %v859, %v722
      %v877 = vsel %vm862, %v860, %v724
      %v878 = vsel %vm862, %v861, %v726
      %v879 = vld [vmem:[%s1] sm:$0xff]
      %v880 = vld [vmem:[%s1 + $0x8] sm:$0xff]
      %v881 = vld [vmem:[%s1 + $0x10] sm:$0xff]
      %v882 = vld [vmem:[%s1 + $0x18] sm:$0xff]
      %v883 = vld [vmem:[%s1 + $0x20] sm:$0xf]
      %v884 = vld [vmem:[%s2] sm:$0x1]
      %v886 = vlaneseq
      %v887 = vshrl.u32 %v886, 7
      %v888 = vsub.s32 0, %v887
      %v889 = vrot.slane %v884, %v888
      %vm891 = vcmask 293888
      %v893 = vsel %vm891, %v863, 0
      %v896 = vsel %vm891, %v864, 0
      %v899 = vsel %vm891, %v865, 0
      %v902 = vsel %vm891, %v866, 0
      %v905 = vsel %vm891, %v867, 0
      %v908 = vsel %vm891, %v868, 0
      %v911 = vsel %vm891, %v869, 0
      %v914 = vsel %vm891, %v870, 0
      %v917 = vsel %vm891, %v871, 0
      %v920 = vsel %vm891, %v872, 0
      %v923 = vsel %vm891, %v873, 0
      %v926 = vsel %vm891, %v874, 0
      %v929 = vsel %vm891, %v875, 0
      %v932 = vsel %vm891, %v876, 0
      %v935 = vsel %vm891, %v877, 0
      %v938 = vsel %vm891, %v878, 0
      %vm940 = vcmask 1043456
      %v942 = vsel %vm940, %v883, 0
      %944 = vmatprep.subr.mxu0 0.0
      %945 = vmatpush1.msra.mxu0 0.0
      %946 = vmatprep.subr.mxu0 0.0
      %947 = vmatpush1.msra.mxu0 0.0
      %948 = vmatprep.subr.mxu0 0.0
      %949 = vmatpush1.msra.mxu0 0.0
      %950 = vmatprep.subr.mxu0 0.0
      %951 = vmatpush1.msra.mxu0 0.0
      %952 = vmatprep.subr.mxu0 0.0
      %953 = vmatpush1.msra.mxu0 0.0
      %954 = vmatprep.subr.mxu0 0.0
      %955 = vmatpush1.msra.mxu0 0.0
      %956 = vmatprep.subr.mxu0 0.0
      %957 = vmatpush1.msra.mxu0 0.0
      %958 = vmatprep.subr.mxu0 0.0
      %959 = vmatpush1.msra.mxu0 0.0
      %960 = vmatprep.subr.mxu0 0.0
      %961 = vmatpush1.msra.mxu0 0.0
      %962 = vmatprep.subr.mxu0 0.0
      %963 = vmatpush1.msra.mxu0 0.0
      %964 = vmatprep.subr.mxu0 0.0
      %965 = vmatpush1.msra.mxu0 0.0
      %966 = vmatprep.subr.mxu0 0.0
      %967 = vmatpush1.msra.mxu0 %v942
      %968 = vmatprep.subr.mxu0 0.0
      %969 = vmatpush1.msra.mxu0 %v882
      %970 = vmatprep.subr.mxu0 0.0
      %971 = vmatpush1.msra.mxu0 %v881
      %972 = vmatprep.subr.mxu0 0.0
      %973 = vmatpush1.msra.mxu0 %v880
      %974 = vmatprep.subr.mxu0 0.0
      %975 = vmatpush1.msra.mxu0 %v879
      %976 = vmatprep.subr.mxu0 0.0
      %977 = vmatpush2.msra.mxu0 0.0
      %978 = vmatprep.subr.mxu0 0.0
      %979 = vmatpush2.msra.mxu0 0.0
      %980 = vmatprep.subr.mxu0 0.0
      %981 = vmatpush2.msra.mxu0 0.0
      %982 = vmatprep.subr.mxu0 0.0
      %983 = vmatpush2.msra.mxu0 0.0
      %984 = vmatprep.subr.mxu0 0.0
      %985 = vmatpush2.msra.mxu0 0.0
      %986 = vmatprep.subr.mxu0 0.0
      %987 = vmatpush2.msra.mxu0 0.0
      %988 = vmatprep.subr.mxu0 0.0
      %989 = vmatpush2.msra.mxu0 0.0
      %990 = vmatprep.subr.mxu0 0.0
      %991 = vmatpush2.msra.mxu0 0.0
      %992 = vmatprep.subr.mxu0 0.0
      %993 = vmatpush2.msra.mxu0 0.0
      %994 = vmatprep.subr.mxu0 0.0
      %995 = vmatpush2.msra.mxu0 0.0
      %996 = vmatprep.subr.mxu0 0.0
      %997 = vmatpush2.msra.mxu0 0.0
      %998 = vmatprep.subr.mxu0 0.0
      %999 = vmatpush2.msra.mxu0 0.0
      %1000 = vmatprep.subr.mxu0 0.0
      %1001 = vmatpush2.msra.mxu0 0.0
      %1002 = vmatprep.subr.mxu0 0.0
      %1003 = vmatpush2.msra.mxu0 0.0
      %1004 = vmatprep.subr.mxu0 0.0
      %1005 = vmatpush2.msra.mxu0 0.0
      %1006 = vmatprep.subr.mxu0 0.0
      %1007 = vmatpush2.msra.mxu0 0.0
      %1008 = vmatprep.mubr.f32.mxu0 0.0
      %1009 = vmatmul.mubr.f32.gmra.mxu0 %v893
      %v1010 = vpop.f32.mrf.mxu0
      %v1011 = vadd.f32 %v889, %v1010
      %v1012 = vpop.f32.mrf.mxu0
      %1013 = vmatprep.mubr.f32.mxu0 0.0
      %1014 = vmatmul.mubr.f32.gmra.mxu0 %v896
      %v1015 = vpop.f32.mrf.mxu0
      %v1016 = vadd.f32 %v889, %v1015
      %v1017 = vpop.f32.mrf.mxu0
      %1018 = vmatprep.mubr.f32.mxu0 0.0
      %1019 = vmatmul.mubr.f32.gmra.mxu0 %v899
      %v1020 = vpop.f32.mrf.mxu0
      %v1021 = vadd.f32 %v889, %v1020
      %v1022 = vpop.f32.mrf.mxu0
      %1023 = vmatprep.mubr.f32.mxu0 0.0
      %1024 = vmatmul.mubr.f32.gmra.mxu0 %v902
      %v1025 = vpop.f32.mrf.mxu0
      %v1026 = vadd.f32 %v889, %v1025
      %v1027 = vpop.f32.mrf.mxu0
      %1028 = vmatprep.mubr.f32.mxu0 0.0
      %1029 = vmatmul.mubr.f32.gmra.mxu0 %v905
      %v1030 = vpop.f32.mrf.mxu0
      %v1031 = vadd.f32 %v889, %v1030
      %v1032 = vpop.f32.mrf.mxu0
      %1033 = vmatprep.mubr.f32.mxu0 0.0
      %1034 = vmatmul.mubr.f32.gmra.mxu0 %v908
      %v1035 = vpop.f32.mrf.mxu0
      %v1036 = vadd.f32 %v889, %v1035
      %v1037 = vpop.f32.mrf.mxu0
      %1038 = vmatprep.mubr.f32.mxu0 0.0
      %1039 = vmatmul.mubr.f32.gmra.mxu0 %v911
      %v1040 = vpop.f32.mrf.mxu0
      %v1041 = vadd.f32 %v889, %v1040
      %v1042 = vpop.f32.mrf.mxu0
      %1043 = vmatprep.mubr.f32.mxu0 0.0
      %1044 = vmatmul.mubr.f32.gmra.mxu0 %v914
      %v1045 = vpop.f32.mrf.mxu0
      %v1046 = vadd.f32 %v889, %v1045
      %v1047 = vpop.f32.mrf.mxu0
      %1048 = vmatprep.mubr.f32.mxu0 0.0
      %1049 = vmatmul.mubr.f32.gmra.mxu0 %v917
      %v1050 = vpop.f32.mrf.mxu0
      %v1051 = vadd.f32 %v889, %v1050
      %v1052 = vpop.f32.mrf.mxu0
      %1053 = vmatprep.mubr.f32.mxu0 0.0
      %1054 = vmatmul.mubr.f32.gmra.mxu0 %v920
      %v1055 = vpop.f32.mrf.mxu0
      %v1056 = vadd.f32 %v889, %v1055
      %v1057 = vpop.f32.mrf.mxu0
      %1058 = vmatprep.mubr.f32.mxu0 0.0
      %1059 = vmatmul.mubr.f32.gmra.mxu0 %v923
      %v1060 = vpop.f32.mrf.mxu0
      %v1061 = vadd.f32 %v889, %v1060
      %v1062 = vpop.f32.mrf.mxu0
      %1063 = vmatprep.mubr.f32.mxu0 0.0
      %1064 = vmatmul.mubr.f32.gmra.mxu0 %v926
      %v1065 = vpop.f32.mrf.mxu0
      %v1066 = vadd.f32 %v889, %v1065
      %v1067 = vpop.f32.mrf.mxu0
      %1068 = vmatprep.mubr.f32.mxu0 0.0
      %1069 = vmatmul.mubr.f32.gmra.mxu0 %v929
      %v1070 = vpop.f32.mrf.mxu0
      %v1071 = vadd.f32 %v889, %v1070
      %v1072 = vpop.f32.mrf.mxu0
      %1073 = vmatprep.mubr.f32.mxu0 0.0
      %1074 = vmatmul.mubr.f32.gmra.mxu0 %v932
      %v1075 = vpop.f32.mrf.mxu0
      %v1076 = vadd.f32 %v889, %v1075
      %v1077 = vpop.f32.mrf.mxu0
      %1078 = vmatprep.mubr.f32.mxu0 0.0
      %1079 = vmatmul.mubr.f32.gmra.mxu0 %v935
      %v1080 = vpop.f32.mrf.mxu0
      %v1081 = vadd.f32 %v889, %v1080
      %v1082 = vpop.f32.mrf.mxu0
      %1083 = vmatprep.mubr.f32.mxu0 0.0
      %1084 = vmatmul.mubr.f32.gmra.mxu0 %v938
      %v1085 = vpop.f32.mrf.mxu0
      %v1086 = vadd.f32 %v889, %v1085
      %v1087 = vpop.f32.mrf.mxu0
      %1088 = vdwg.mxu0
      %1089 = vst.msk [vmem:[%s192] sm:$0xff] %vm760, %v1011
      %1090 = vst.msk [vmem:[%s192 + $0x8] sm:$0xff] %vm760, %v1016
      %1091 = vst.msk [vmem:[%s192 + $0x10] sm:$0xff] %vm760, %v1021
      %1092 = vst.msk [vmem:[%s192 + $0x18] sm:$0xff] %vm760, %v1026
      %1093 = vst.msk [vmem:[%s192 + $0x20] sm:$0xff] %vm760, %v1031
      %1094 = vst.msk [vmem:[%s192 + $0x28] sm:$0xff] %vm760, %v1036
      %1095 = vst.msk [vmem:[%s192 + $0x30] sm:$0xff] %vm760, %v1041
      %1096 = vst.msk [vmem:[%s192 + $0x38] sm:$0xff] %vm760, %v1046
      %1097 = vst.msk [vmem:[%s192 + $0x40] sm:$0xff] %vm760, %v1051
      %1098 = vst.msk [vmem:[%s192 + $0x48] sm:$0xff] %vm760, %v1056
      %1099 = vst.msk [vmem:[%s192 + $0x50] sm:$0xff] %vm760, %v1061
      %1100 = vst.msk [vmem:[%s192 + $0x58] sm:$0xff] %vm760, %v1066
      %1101 = vst.msk [vmem:[%s192 + $0x60] sm:$0xff] %vm760, %v1071
      %1102 = vst.msk [vmem:[%s192 + $0x68] sm:$0xff] %vm760, %v1076
      %1103 = vst.msk [vmem:[%s192 + $0x70] sm:$0xff] %vm760, %v1081
      %1104 = vst.msk [vmem:[%s192 + $0x78] sm:$0xff] %vm760, %v1086
      %s1105 = smul.u32 16, %s19
      %p1106 = scmp.lt.s32.totalorder %s18, 1
      %s1107 = scalar_select %p1106, %s18, 1
      %p1108 = scmp.lt.s32.totalorder %s1105, 31
      %s1109 = scalar_select %p1108, %s1105, 31
      %s1110 = smul.addr %s1107, 32
      %s1111 = sadd.s32 %s1109, %s1110
      %s1112 = smul.addr %s1111, 8
      %s1113 = scalar_lea.vmem %s3, %s1112
      // Predicated region
      $region33: #{tpu_custom_call.1} parent=31 // pred_check
        %p1114 = pneg %p114
      $region34: #{tpu_custom_call.1} parent=31 // pred_check_branch
        %1116 = sbr.rel (%p1114) target = $region36
      $region35: #{tpu_custom_call.1} parent=31 // pred_region
        %s1117 = smul.u32 16, %s19
      $region36: #{tpu_custom_call.1} parent=31 // pred_fallthru
        _
    $region32: #{tpu_custom_call.1} parent=5 // pred_fallthru
      _
    %p1118 = scmp.le.s32.totalorder 2, %s9
    // Predicated region
    $region37: #{tpu_custom_call.1} parent=5 // pred_check
      %p1119 = pneg %p1118
    $region38: #{tpu_custom_call.1} parent=5 // pred_check_branch
      %1121 = sbr.rel (%p1119) target = $region40
    $region39: #{tpu_custom_call.1} parent=5 // pred_region
      %s1122 = ssub.s32 %s9, 2
      // Predicated region
      $region41: #{tpu_custom_call.1} parent=39 // pred_check
        %p1123 = pneg %p120
      $region42: #{tpu_custom_call.1} parent=39 // pred_check_branch
        %1125 = sbr.rel (%p1123) target = $region44
      $region43: #{tpu_custom_call.1} parent=39 // pred_region
        %s1126 = smul.u32 16, %s21
        %p1127 = scmp.lt.s32.totalorder %s20, 1
        %s1128 = scalar_select %p1127, %s20, 1
        %p1129 = scmp.lt.s32.totalorder %s1126, 31
        %s1130 = scalar_select %p1129, %s1126, 31
        %s1131 = smul.addr %s1128, 32
        %s1132 = sadd.s32 %s1130, %s1131
        %s1133 = smul.addr %s1132, 8
        %s1134 = scalar_lea.vmem %s3, %s1133
      $region44: #{tpu_custom_call.1} parent=39 // pred_fallthru
        _
    $region40: #{tpu_custom_call.1} parent=5 // pred_fallthru
      _
  $region6: #{tpu_custom_call.1} parent=0 // loop_footer
    %s13 = sadd.s32 1, %s9
  $region7: #{tpu_custom_call.1} parent=0 // loop_footer_branch
    %8 = sbr.rel target = $region3
  $region8: #{tpu_custom_call.1} parent=0 // loop_exit
    _

</llo_original>
